<compile_context>
chip_gen: v7x
topology: tpu7x:2x2x1
jax: 0.10.0
libtpu: 0.0.40
codegen_flags: <defaults>
</compile_context>

<pallas_src>
import jax
import jax.numpy as jnp
from jax.experimental import pallas as pl
from jax.experimental.pallas import tpu as pltpu

LAYER_DIMS = [5, 256, 128, 64, 32, 16, 2]

# Per-layer contraction dims as stored in the packed weight buffer
# (first layer padded 5 -> 8; the rest are already multiples of 8).
K_PADDED = [8] + LAYER_DIMS[1:-1]            # [8, 256, 128, 64, 32, 16]
ROW_STARTS = [0]
for _k in K_PADDED[:-1]:
    ROW_STARTS.append(ROW_STARTS[-1] + _k)   # [0, 8, 264, 392, 456, 488]
TOTAL_ROWS = ROW_STARTS[-1] + K_PADDED[-1]   # 504 (multiple of 8)
MAX_N = max(LAYER_DIMS[1:])                  # 256 (multiple of 128)
NUM_LAYERS = len(LAYER_DIMS) - 1             # 6


def _round_up(x, m):
    return ((x + m - 1) // m) * m


def mlp_kernel(x_ref, w_ref, b_ref, o_ref):
    """Fused MLP forward: (Linear+ReLU) x5 -> Linear -> Softmax(dim=1).

    x_ref: (TILE_B, 8)  f32  (features zero-padded 5 -> 8)
    w_ref: (504, 256)   bf16 packed weights (resident across grid steps)
    b_ref: (8, 256)     f32  packed biases (row i = bias of layer i)
    o_ref: (TILE_B, 2)  f32
    """
    h = x_ref[...].astype(jnp.float32)

    for i in range(NUM_LAYERS):
        k_pad = K_PADDED[i]
        n = LAYER_DIMS[i + 1]
        r0 = ROW_STARTS[i]
        # Static slices of the resident packed buffers (sublane offsets are
        # multiples of 8; lane slices start at 0) -> zero-cost views.
        w = w_ref[r0:r0 + k_pad, :n]                 # bf16 (k_pad, n)
        b = b_ref[i, :n]                             # f32  (n,)
        y = jnp.dot(h.astype(jnp.bfloat16), w,
                    preferred_element_type=jnp.float32) + b
        h = jnp.maximum(y, 0.0) if i < NUM_LAYERS - 1 else y

    # Softmax over the feature axis (dim=1), max-stabilized, in f32.
    m = jnp.max(h, axis=1, keepdims=True)
    e = jnp.exp(h - m)
    denom = jnp.sum(e, axis=1, keepdims=True)
    o_ref[...] = (e / denom).astype(o_ref.dtype)


def make_params(key):
    """PyTorch nn.Linear-style uniform(+-1/sqrt(fan_in)) init, f32 master copies."""
    params = []
    for i in range(NUM_LAYERS):
        fan_in, fan_out = LAYER_DIMS[i], LAYER_DIMS[i + 1]
        key, kw, kb = jax.random.split(key, 3)
        bound = 1.0 / (fan_in ** 0.5)
        w = jax.random.uniform(kw, (fan_in, fan_out), jnp.float32, -bound, bound)
        b = jax.random.uniform(kb, (fan_out,), jnp.float32, -bound, bound)
        params.append((w, b))
    return params


def pack_params(params):
    """Pack all weights into one bf16 buffer and all biases into one f32 buffer."""
    w_packed = jnp.zeros((TOTAL_ROWS, MAX_N), jnp.bfloat16)
    b_packed = jnp.zeros((8, MAX_N), jnp.float32)
    for i, (w, b) in enumerate(params):
        k, n = w.shape
        r0 = ROW_STARTS[i]
        w_packed = w_packed.at[r0:r0 + k, :n].set(w.astype(jnp.bfloat16))
        b_packed = b_packed.at[i, :n].set(b)
    return w_packed, b_packed


def mlp_forward(x, w_packed, b_packed, *, tile_b=1024):
    B = x.shape[0]
    # Pad feature dim 5 -> 8 with zeros (matching zero rows in w_packed).
    xp = jnp.pad(x.astype(jnp.float32),
                 ((0, 0), (0, K_PADDED[0] - LAYER_DIMS[0])))   # (B, 8)

    tb = min(tile_b, _round_up(B, 8))
    Bp = _round_up(B, tb)
    if Bp != B:
        xp = jnp.pad(xp, ((0, Bp - B), (0, 0)))

    grid = (Bp // tb,)
    out = pl.pallas_call(
        mlp_kernel,
        out_shape=jax.ShapeDtypeStruct((Bp, LAYER_DIMS[-1]), jnp.float32),
        grid_spec=pltpu.PrefetchScalarGridSpec(
            num_scalar_prefetch=0,
            grid=grid,
            in_specs=[
                pl.BlockSpec((tb, K_PADDED[0]), lambda i: (i, 0)),      # x tile
                pl.BlockSpec((TOTAL_ROWS, MAX_N), lambda i: (0, 0)),    # weights, resident
                pl.BlockSpec((8, MAX_N), lambda i: (0, 0)),             # biases, resident
            ],
            out_specs=pl.BlockSpec((tb, LAYER_DIMS[-1]), lambda i: (i, 0)),
        ),
        compiler_params=pltpu.CompilerParams(
            dimension_semantics=("parallel",)),
    )(xp, w_packed, b_packed)
    return out[:B]


if __name__ == "__main__":
    key = jax.random.PRNGKey(0)
    key, kx = jax.random.split(key)

    B = 8
    x = jax.random.normal(kx, (B, LAYER_DIMS[0]), jnp.float32)
    params = make_params(key)
    w_packed, b_packed = pack_params(params)

    out = jax.block_until_ready(mlp_forward(x, w_packed, b_packed))

    # Reference with the same bf16 weight/activation quantization (f32 accumulate),
    # so the comparison isolates kernel correctness from the chosen precision.
    def ref(x, params):
        h = x
        for i, (w, b) in enumerate(params):
            h = jnp.dot(h.astype(jnp.bfloat16), w.astype(jnp.bfloat16),
                        preferred_element_type=jnp.float32) + b
            if i < len(params) - 1:
                h = jnp.maximum(h, 0.0)
        return jax.nn.softmax(h, axis=1)

    expected = ref(x, params)
    assert out.shape == (B, LAYER_DIMS[-1])
    assert jnp.allclose(out, expected, atol=1e-3, rtol=1e-3), float(
        jnp.max(jnp.abs(out - expected)))
    assert jnp.allclose(jnp.sum(out, axis=1), 1.0, atol=1e-5)

    print("KERNEL_OK")
</pallas_src>

<mosaic_0001>
module attributes {stable_mosaic.version = 11 : i64} {
  func.func @mlp_kernel(%arg0: i32, %arg1: memref<8x8xf32, #tpu.memory_space<vmem>>, %arg2: memref<504x256xbf16, #tpu.memory_space<vmem>>, %arg3: memref<8x256xf32, #tpu.memory_space<vmem>>, %arg4: memref<8x2xf32, #tpu.memory_space<vmem>>) attributes {dimension_semantics = [#tpu.dimension_semantics<parallel>], iteration_bounds = array<i64: 1>, scalar_prefetch = 0 : i64, scratch_operands = 0 : i64, tpu.core_type = #tpu.core_type<tc>, window_params = [{transform_indices = @transform_0, window_bounds = array<i64: 8, 8>}, {pipeline_mode = #tpu.pipeline_mode<synchronous>, transform_indices = @transform_1, window_bounds = array<i64: 504, 256>}, {pipeline_mode = #tpu.pipeline_mode<synchronous>, transform_indices = @transform_2, window_bounds = array<i64: 8, 256>}, {transform_indices = @transform_3, window_bounds = array<i64: 8, 2>}]} {
    %c0 = arith.constant 0 : index
    %c0_0 = arith.constant 0 : index
    %0 = vector.load %arg1[%c0, %c0_0] : memref<8x8xf32, #tpu.memory_space<vmem>>, vector<8x8xf32>
    %c0_1 = arith.constant 0 : index
    %c0_2 = arith.constant 0 : index
    %1 = vector.load %arg2[%c0_1, %c0_2] : memref<504x256xbf16, #tpu.memory_space<vmem>>, vector<8x256xbf16>
    %c0_3 = arith.constant 0 : index
    %c0_4 = arith.constant 0 : index
    %2 = vector.load %arg3[%c0_3, %c0_4] : memref<8x256xf32, #tpu.memory_space<vmem>>, vector<1x256xf32>
    %3 = vector.shape_cast %2 : vector<1x256xf32> to vector<256xf32>
    %4 = arith.truncf %0 : vector<8x8xf32> to vector<8x8xbf16>
    %cst = arith.constant dense<0.000000e+00> : vector<8x256xf32>
    %5 = tpu.matmul %4, %1, %cst {dimension_numbers = #tpu.dot_dimension_numbers<[1], [0], [0], [1], [0, 0, 1, 1], [], []>} : vector<8x8xbf16>, vector<8x256xbf16>, vector<8x256xf32> -> vector<8x256xf32>
    %6 = vector.shape_cast %3 : vector<256xf32> to vector<1x256xf32>
    %7 = vector.broadcast %6 : vector<1x256xf32> to vector<8x256xf32>
    %8 = arith.addf %5, %7 : vector<8x256xf32>
    %cst_5 = arith.constant 0.000000e+00 : f32
    %9 = vector.broadcast %cst_5 : f32 to vector<8x256xf32>
    %10 = arith.maximumf %8, %9 : vector<8x256xf32>
    %c8 = arith.constant 8 : index
    %c0_6 = arith.constant 0 : index
    %11 = vector.load %arg2[%c8, %c0_6] : memref<504x256xbf16, #tpu.memory_space<vmem>>, vector<256x128xbf16>
    %c1 = arith.constant 1 : index
    %c0_7 = arith.constant 0 : index
    %12 = vector.load %arg3[%c1, %c0_7] : memref<8x256xf32, #tpu.memory_space<vmem>>, vector<1x128xf32>
    %13 = vector.shape_cast %12 : vector<1x128xf32> to vector<128xf32>
    %14 = arith.truncf %10 : vector<8x256xf32> to vector<8x256xbf16>
    %cst_8 = arith.constant dense<0.000000e+00> : vector<8x128xf32>
    %15 = tpu.matmul %14, %11, %cst_8 {dimension_numbers = #tpu.dot_dimension_numbers<[1], [0], [0], [1], [0, 0, 1, 1], [], []>} : vector<8x256xbf16>, vector<256x128xbf16>, vector<8x128xf32> -> vector<8x128xf32>
    %16 = vector.shape_cast %13 : vector<128xf32> to vector<1x128xf32>
    %17 = vector.broadcast %16 : vector<1x128xf32> to vector<8x128xf32>
    %18 = arith.addf %15, %17 : vector<8x128xf32>
    %cst_9 = arith.constant 0.000000e+00 : f32
    %19 = vector.broadcast %cst_9 : f32 to vector<8x128xf32>
    %20 = arith.maximumf %18, %19 : vector<8x128xf32>
    %c264 = arith.constant 264 : index
    %c0_10 = arith.constant 0 : index
    %21 = vector.load %arg2[%c264, %c0_10] : memref<504x256xbf16, #tpu.memory_space<vmem>>, vector<128x64xbf16>
    %c2 = arith.constant 2 : index
    %c0_11 = arith.constant 0 : index
    %22 = vector.load %arg3[%c2, %c0_11] : memref<8x256xf32, #tpu.memory_space<vmem>>, vector<1x64xf32>
    %23 = vector.shape_cast %22 : vector<1x64xf32> to vector<64xf32>
    %24 = arith.truncf %20 : vector<8x128xf32> to vector<8x128xbf16>
    %cst_12 = arith.constant dense<0.000000e+00> : vector<8x64xf32>
    %25 = tpu.matmul %24, %21, %cst_12 {dimension_numbers = #tpu.dot_dimension_numbers<[1], [0], [0], [1], [0, 0, 1, 1], [], []>} : vector<8x128xbf16>, vector<128x64xbf16>, vector<8x64xf32> -> vector<8x64xf32>
    %26 = vector.shape_cast %23 : vector<64xf32> to vector<1x64xf32>
    %27 = vector.broadcast %26 : vector<1x64xf32> to vector<8x64xf32>
    %28 = arith.addf %25, %27 : vector<8x64xf32>
    %cst_13 = arith.constant 0.000000e+00 : f32
    %29 = vector.broadcast %cst_13 : f32 to vector<8x64xf32>
    %30 = arith.maximumf %28, %29 : vector<8x64xf32>
    %c392 = arith.constant 392 : index
    %c0_14 = arith.constant 0 : index
    %31 = vector.load %arg2[%c392, %c0_14] : memref<504x256xbf16, #tpu.memory_space<vmem>>, vector<64x32xbf16>
    %c3 = arith.constant 3 : index
    %c0_15 = arith.constant 0 : index
    %32 = vector.load %arg3[%c3, %c0_15] : memref<8x256xf32, #tpu.memory_space<vmem>>, vector<1x32xf32>
    %33 = vector.shape_cast %32 : vector<1x32xf32> to vector<32xf32>
    %34 = arith.truncf %30 : vector<8x64xf32> to vector<8x64xbf16>
    %cst_16 = arith.constant dense<0.000000e+00> : vector<8x32xf32>
    %35 = tpu.matmul %34, %31, %cst_16 {dimension_numbers = #tpu.dot_dimension_numbers<[1], [0], [0], [1], [0, 0, 1, 1], [], []>} : vector<8x64xbf16>, vector<64x32xbf16>, vector<8x32xf32> -> vector<8x32xf32>
    %36 = vector.shape_cast %33 : vector<32xf32> to vector<1x32xf32>
    %37 = vector.broadcast %36 : vector<1x32xf32> to vector<8x32xf32>
    %38 = arith.addf %35, %37 : vector<8x32xf32>
    %cst_17 = arith.constant 0.000000e+00 : f32
    %39 = vector.broadcast %cst_17 : f32 to vector<8x32xf32>
    %40 = arith.maximumf %38, %39 : vector<8x32xf32>
    %c456 = arith.constant 456 : index
    %c0_18 = arith.constant 0 : index
    %41 = vector.load %arg2[%c456, %c0_18] : memref<504x256xbf16, #tpu.memory_space<vmem>>, vector<32x16xbf16>
    %c4 = arith.constant 4 : index
    %c0_19 = arith.constant 0 : index
    %42 = vector.load %arg3[%c4, %c0_19] : memref<8x256xf32, #tpu.memory_space<vmem>>, vector<1x16xf32>
    %43 = vector.shape_cast %42 : vector<1x16xf32> to vector<16xf32>
    %44 = arith.truncf %40 : vector<8x32xf32> to vector<8x32xbf16>
    %cst_20 = arith.constant dense<0.000000e+00> : vector<8x16xf32>
    %45 = tpu.matmul %44, %41, %cst_20 {dimension_numbers = #tpu.dot_dimension_numbers<[1], [0], [0], [1], [0, 0, 1, 1], [], []>} : vector<8x32xbf16>, vector<32x16xbf16>, vector<8x16xf32> -> vector<8x16xf32>
    %46 = vector.shape_cast %43 : vector<16xf32> to vector<1x16xf32>
    %47 = vector.broadcast %46 : vector<1x16xf32> to vector<8x16xf32>
    %48 = arith.addf %45, %47 : vector<8x16xf32>
    %cst_21 = arith.constant 0.000000e+00 : f32
    %49 = vector.broadcast %cst_21 : f32 to vector<8x16xf32>
    %50 = arith.maximumf %48, %49 : vector<8x16xf32>
    %c488 = arith.constant 488 : index
    %c0_22 = arith.constant 0 : index
    %51 = vector.load %arg2[%c488, %c0_22] : memref<504x256xbf16, #tpu.memory_space<vmem>>, vector<16x2xbf16>
    %c5 = arith.constant 5 : index
    %c0_23 = arith.constant 0 : index
    %52 = vector.load %arg3[%c5, %c0_23] : memref<8x256xf32, #tpu.memory_space<vmem>>, vector<1x2xf32>
    %53 = vector.shape_cast %52 : vector<1x2xf32> to vector<2xf32>
    %54 = arith.truncf %50 : vector<8x16xf32> to vector<8x16xbf16>
    %cst_24 = arith.constant dense<0.000000e+00> : vector<8x2xf32>
    %55 = tpu.matmul %54, %51, %cst_24 {dimension_numbers = #tpu.dot_dimension_numbers<[1], [0], [0], [1], [0, 0, 1, 1], [], []>} : vector<8x16xbf16>, vector<16x2xbf16>, vector<8x2xf32> -> vector<8x2xf32>
    %56 = vector.shape_cast %53 : vector<2xf32> to vector<1x2xf32>
    %57 = vector.broadcast %56 : vector<1x2xf32> to vector<8x2xf32>
    %58 = arith.addf %55, %57 : vector<8x2xf32>
    %cst_25 = arith.constant dense<0xFF800000> : vector<8xf32>
    %59 = vector.multi_reduction <maximumf>, %58, %cst_25 [1] : vector<8x2xf32> to vector<8xf32>
    %60 = vector.shape_cast %59 : vector<8xf32> to vector<8x1xf32>
    %61 = vector.broadcast %60 : vector<8x1xf32> to vector<8x2xf32>
    %62 = arith.subf %58, %61 : vector<8x2xf32>
    %63 = math.exp %62 : vector<8x2xf32>
    %cst_26 = arith.constant dense<0.000000e+00> : vector<8xf32>
    %64 = vector.multi_reduction <add>, %63, %cst_26 [1] : vector<8x2xf32> to vector<8xf32>
    %65 = vector.shape_cast %64 : vector<8xf32> to vector<8x1xf32>
    %66 = vector.broadcast %65 : vector<8x1xf32> to vector<8x2xf32>
    %67 = arith.divf %63, %66 : vector<8x2xf32>
    %c0_27 = arith.constant 0 : index
    %c0_28 = arith.constant 0 : index
    %68 = vector.load %arg4[%c0_27, %c0_28] : memref<8x2xf32, #tpu.memory_space<vmem>>, vector<8x2xf32>
    tpu.vector_store %arg4[%c0_27, %c0_28], %67 {strides = array<i32>} : memref<8x2xf32, #tpu.memory_space<vmem>>, vector<8x2xf32>,
    return
  }
  func.func @transform_0(%arg0: i32) -> (i32, i32) {
    %c0_i32 = arith.constant 0 : i32
    %c0_i32_0 = arith.constant 0 : i32
    return %arg0, %c0_i32 : i32, i32
  }
  func.func @transform_1(%arg0: i32) -> (i32, i32) {
    %c0_i32 = arith.constant 0 : i32
    %c0_i32_0 = arith.constant 0 : i32
    %c0_i32_1 = arith.constant 0 : i32
    return %c0_i32, %c0_i32_0 : i32, i32
  }
  func.func @transform_2(%arg0: i32) -> (i32, i32) {
    %c0_i32 = arith.constant 0 : i32
    %c0_i32_0 = arith.constant 0 : i32
    %c0_i32_1 = arith.constant 0 : i32
    return %c0_i32, %c0_i32_0 : i32, i32
  }
  func.func @transform_3(%arg0: i32) -> (i32, i32) {
    %c0_i32 = arith.constant 0 : i32
    %c0_i32_0 = arith.constant 0 : i32
    return %arg0, %c0_i32 : i32, i32
  }
}

</mosaic_0001>

<llo_original>
// kernel: tpu_custom_call.1
$region0: #{tpu_custom_call.1}
  #allocation0 [shape = 'u32[]', space=smem, size = 0x4, offset = 0x4, fixed_abs, tag = 'smem constant byte address 0x4 - core index']
  #allocation1 [shape = 'u32[144,128]{1,0:T(1,128)}', space=vmem, size = 0x12000, scoped, tag = 'internal scratch']
  %s0 = inlined_call_operand.hbm [shape: f32[8,8], index: 0, kind: input, shape index: {}]
  %s1 = inlined_call_operand.hbm [shape: bf16[504,256], index: 1, kind: input, shape index: {}]
  %s2 = inlined_call_operand.hbm [shape: f32[8,256], index: 2, kind: input, shape index: {}]
  %s3 = inlined_call_operand.vmem [shape: f32[8,2], index: 3, kind: output, shape index: {}]
  %s4 = sld [smem:[#allocation0]]
  $region34: #{tpu_custom_call.1} parent=0
    _
  %s6 = ssub.s32 1, %s4
  %s7 = scalar_select 0, %s6, %s4
  $region1: #{tpu_custom_call.1} parent=0
    #allocation2 [shape = 'u8[4096]{0}', space=vmem, size = 0x1000, scoped, tag = 'input window, operand 0, single buffered']
    #allocation3 [shape = 's32[1]{0}', space=sflag, size = 0x4, scoped, tag = 'scoped memory for tpu_custom_call.1']
    #allocation4 [shape = 'u8[258048]{0}', space=vmem, size = 0x3f000, scoped, tag = 'input window, operand 1, single buffered']
    #allocation5 [shape = 's32[1]{0}', space=sflag, size = 0x4, scoped, tag = 'scoped memory for tpu_custom_call.1']
    #allocation6 [shape = 'u8[8192]{0}', space=vmem, size = 0x2000, scoped, tag = 'input window, operand 2, single buffered']
    %8 = vsyncpa [#allocation3], 0
    %9 = vsyncpa [#allocation5], 0
    // Predicated region
    $region2: #{tpu_custom_call.1} parent=1 // pred_check
      _
    $region3: #{tpu_custom_call.1} parent=1 // pred_check_branch
      %11 = sbr.rel (0) target = $region5
    $region4: #{tpu_custom_call.1} parent=1 // pred_region
      %s13 = ssub.s32 128, 128
      %14 = vsyncadd [#allocation3], %s13
      %s16 = sshll.u32 [#allocation2], 4
      %s17 = int_to_ptr.vmem [resolvable:$true] %s16
      %19 = dma.hbm_to_vmem [thread:$0]  %s0, 128, %s17, [#allocation3]
    $region5: #{tpu_custom_call.1} parent=1 // pred_fallthru
      _
    // Predicated region
    $region6: #{tpu_custom_call.1} parent=1 // pred_check
      _
    $region7: #{tpu_custom_call.1} parent=1 // pred_check_branch
      %21 = sbr.rel (0) target = $region9
    $region8: #{tpu_custom_call.1} parent=1 // pred_region
      %s23 = ssub.s32 8064, 8064
      %24 = vsyncadd [#allocation5], %s23
      %s25 = sshll.u32 [#allocation4], 4
      %s26 = int_to_ptr.vmem [resolvable:$true] %s25
      %31 = dma.hbm_to_vmem [thread:$0]  %s1, 8064, %s26, [#allocation5], 128, 128, 8
    $region9: #{tpu_custom_call.1} parent=1 // pred_fallthru
      _
    // Predicated region
    $region10: #{tpu_custom_call.1} parent=1 // pred_check
      _
    $region11: #{tpu_custom_call.1} parent=1 // pred_check_branch
      %33 = sbr.rel (0) target = $region13
    $region12: #{tpu_custom_call.1} parent=1 // pred_region
      %s35 = ssub.s32 256, 256
      %36 = vsyncadd [#allocation5], %s35
      %s38 = sshll.u32 [#allocation6], 4
      %s39 = int_to_ptr.vmem [resolvable:$true] %s38
      %41 = dma.hbm_to_vmem [thread:$0]  %s2, 256, %s39, [#allocation5]
    $region13: #{tpu_custom_call.1} parent=1 // pred_fallthru
      _
    // Predicated region
    $region14: #{tpu_custom_call.1} parent=1 // pred_check
      _
    $region15: #{tpu_custom_call.1} parent=1 // pred_check_branch
      %43 = sbr.rel (0) target = $region17
    $region16: #{tpu_custom_call.1} parent=1 // pred_region
      %44 = dma.done [#allocation3], 128
    $region17: #{tpu_custom_call.1} parent=1 // pred_fallthru
      _
    // Predicated region
    $region18: #{tpu_custom_call.1} parent=1 // pred_check
      _
    $region19: #{tpu_custom_call.1} parent=1 // pred_check_branch
      %46 = sbr.rel (0) target = $region21
    $region20: #{tpu_custom_call.1} parent=1 // pred_region
      %47 = dma.done [#allocation5], 8064
    $region21: #{tpu_custom_call.1} parent=1 // pred_fallthru
      _
    // Predicated region
    $region22: #{tpu_custom_call.1} parent=1 // pred_check
      _
    $region23: #{tpu_custom_call.1} parent=1 // pred_check_branch
      %49 = sbr.rel (0) target = $region25
    $region24: #{tpu_custom_call.1} parent=1 // pred_region
      %50 = dma.done [#allocation5], 256
    $region25: #{tpu_custom_call.1} parent=1 // pred_fallthru
      _
    %v52 = vld [vmem:[#allocation2] sm:$0xff]
    %v53 = vld [vmem:[#allocation4] sm:$0xff]
    %v54 = vld [vmem:[#allocation6] ss:$8 sm:$0x3]
    %v55 = vpack.c.bf16 %v52, %v52
    %v57 = vlaneseq
    %v58 = vshrl.u32 %v57, 7
    %v59 = vsub.s32 0, %v58
    %v60 = vrot.slane %v54, %v59
    %v61 = vlaneseq
    %v62 = vshrl.u32 %v61, 7
    %v63 = vsub.s32 1, %v62
    %v64 = vrot.slane %v54, %v63
    %v68 = vunpack.c.l.b16 %v53
    %v69 = vunpack.c.h.b16 %v53
    %v70 = vpack.c.b16 %v68, %v68
    %v71 = vpack.c.b16 %v69, %v69
    %vm72 = vcmask 64512
    %v74 = vsel %vm72, %v55, 0
    %vm76 = vcmask 1043456
    %v78 = vsel %vm76, %v70, 0
    %v81 = vsel %vm76, %v71, 0
    %83 = vmatprep.subr.bf16.mxu0 %v81
    %84 = vmatpush1.bf16.msra.mxu0 %v78
    %85 = vmatprep.subr.bf16.mxu0 0
    %86 = vmatpush1.bf16.msra.mxu0 0
    %87 = vmatprep.subr.bf16.mxu0 0
    %88 = vmatpush1.bf16.msra.mxu0 0
    %89 = vmatprep.subr.bf16.mxu0 0
    %90 = vmatpush1.bf16.msra.mxu0 0
    %91 = vmatprep.subr.bf16.mxu0 0
    %92 = vmatpush1.bf16.msra.mxu0 0
    %93 = vmatprep.subr.bf16.mxu0 0
    %94 = vmatpush1.bf16.msra.mxu0 0
    %95 = vmatprep.subr.bf16.mxu0 0
    %96 = vmatpush1.bf16.msra.mxu0 0
    %97 = vmatprep.subr.bf16.mxu0 0
    %98 = vmatpush1.bf16.msra.mxu0 0
    %99 = vmatprep.subr.bf16.mxu0 0
    %100 = vmatpush1.bf16.msra.mxu0 0
    %101 = vmatprep.subr.bf16.mxu0 0
    %102 = vmatpush1.bf16.msra.mxu0 0
    %103 = vmatprep.subr.bf16.mxu0 0
    %104 = vmatpush1.bf16.msra.mxu0 0
    %105 = vmatprep.subr.bf16.mxu0 0
    %106 = vmatpush1.bf16.msra.mxu0 0
    %107 = vmatprep.subr.bf16.mxu0 0
    %108 = vmatpush1.bf16.msra.mxu0 0
    %109 = vmatprep.subr.bf16.mxu0 0
    %110 = vmatpush1.bf16.msra.mxu0 0
    %111 = vmatprep.subr.bf16.mxu0 0
    %112 = vmatpush1.bf16.msra.mxu0 0
    %113 = vmatprep.subr.bf16.mxu0 0
    %114 = vmatpush1.bf16.msra.mxu0 0
    %115 = vmatprep.mubr.bf16.mxu0 0
    %116 = vmatmul.mubr.bf16.gmra.mrb[0].mxu0 %v74
    %v117 = vpop.f32.mrb[0].mxu0
    %v118 = vadd.f32 %v60, %v117
    %v119 = vpop.f32.mrb[0].mxu0
    %v120 = vadd.f32 %v64, %v119
    %v121 = vpop.f32.mrb[0].mxu0
    %v122 = vpop.f32.mrb[0].mxu0
    %123 = vdwg.mxu0
    %v124 = vmax.f32 %v118, 0.0
    %v125 = vmax.f32 %v120, 0.0
    %v126 = vld [vmem:[#allocation4 + $0x8] sm:$0xf]
    %v127 = vld [vmem:[#allocation4 + $0x10] sm:$0xf]
    %v128 = vld [vmem:[#allocation4 + $0x18] sm:$0xf]
    %v129 = vld [vmem:[#allocation4 + $0x20] sm:$0xf]
    %v130 = vld [vmem:[#allocation4 + $0x28] sm:$0xf]
    %v131 = vld [vmem:[#allocation4 + $0x30] sm:$0xf]
    %v132 = vld [vmem:[#allocation4 + $0x38] sm:$0xf]
    %v133 = vld [vmem:[#allocation4 + $0x40] sm:$0xf]
    %v134 = vld [vmem:[#allocation4 + $0x48] sm:$0xf]
    %v135 = vld [vmem:[#allocation4 + $0x50] sm:$0xf]
    %v136 = vld [vmem:[#allocation4 + $0x58] sm:$0xf]
    %v137 = vld [vmem:[#allocation4 + $0x60] sm:$0xf]
    %v138 = vld [vmem:[#allocation4 + $0x68] sm:$0xf]
    %v139 = vld [vmem:[#allocation4 + $0x70] sm:$0xf]
    %v140 = vld [vmem:[#allocation4 + $0x78] sm:$0xf]
    %v141 = vld [vmem:[#allocation4 + $0x80] sm:$0xf]
    %v142 = vld [vmem:[#allocation4 + $0x88] sm:$0xf]
    %v143 = vld [vmem:[#allocation4 + $0x90] sm:$0xf]
    %v144 = vld [vmem:[#allocation4 + $0x98] sm:$0xf]
    %v145 = vld [vmem:[#allocation4 + $0xa0] sm:$0xf]
    %v146 = vld [vmem:[#allocation4 + $0xa8] sm:$0xf]
    %v147 = vld [vmem:[#allocation4 + $0xb0] sm:$0xf]
    %v148 = vld [vmem:[#allocation4 + $0xb8] sm:$0xf]
    %v149 = vld [vmem:[#allocation4 + $0xc0] sm:$0xf]
    %v150 = vld [vmem:[#allocation4 + $0xc8] sm:$0xf]
    %v151 = vld [vmem:[#allocation4 + $0xd0] sm:$0xf]
    %v152 = vld [vmem:[#allocation4 + $0xd8] sm:$0xf]
    %v153 = vld [vmem:[#allocation4 + $0xe0] sm:$0xf]
    %v154 = vld [vmem:[#allocation4 + $0xe8] sm:$0xf]
    %v155 = vld [vmem:[#allocation4 + $0xf0] sm:$0xf]
    %v156 = vld [vmem:[#allocation4 + $0xf8] sm:$0xf]
    %v157 = vld [vmem:[#allocation4 + $0x100] sm:$0xf]
    %v158 = vld [vmem:[#allocation6 + $0x1] ss:$0 sm:$0xff]
    %v159 = vpack.c.bf16 %v124, %v124
    %v160 = vpack.c.bf16 %v125, %v125
    %v193 = vunpack.c.l.b16 %v126
    %v194 = vunpack.c.l.b16 %v127
    %v195 = vunpack.c.l.b16 %v128
    %v196 = vunpack.c.l.b16 %v129
    %v197 = vunpack.c.l.b16 %v130
    %v198 = vunpack.c.l.b16 %v131
    %v199 = vunpack.c.l.b16 %v132
    %v200 = vunpack.c.l.b16 %v133
    %v201 = vunpack.c.l.b16 %v134
    %v202 = vunpack.c.l.b16 %v135
    %v203 = vunpack.c.l.b16 %v136
    %v204 = vunpack.c.l.b16 %v137
    %v205 = vunpack.c.l.b16 %v138
    %v206 = vunpack.c.l.b16 %v139
    %v207 = vunpack.c.l.b16 %v140
    %v208 = vunpack.c.l.b16 %v141
    %v209 = vunpack.c.l.b16 %v142
    %v210 = vunpack.c.l.b16 %v143
    %v211 = vunpack.c.l.b16 %v144
    %v212 = vunpack.c.l.b16 %v145
    %v213 = vunpack.c.l.b16 %v146
    %v214 = vunpack.c.l.b16 %v147
    %v215 = vunpack.c.l.b16 %v148
    %v216 = vunpack.c.l.b16 %v149
    %v217 = vunpack.c.l.b16 %v150
    %v218 = vunpack.c.l.b16 %v151
    %v219 = vunpack.c.l.b16 %v152
    %v220 = vunpack.c.l.b16 %v153
    %v221 = vunpack.c.l.b16 %v154
    %v222 = vunpack.c.l.b16 %v155
    %v223 = vunpack.c.l.b16 %v156
    %v224 = vunpack.c.l.b16 %v157
    %v225 = vpack.c.b16 %v194, %v193
    %v226 = vpack.c.b16 %v196, %v195
    %v227 = vpack.c.b16 %v198, %v197
    %v228 = vpack.c.b16 %v200, %v199
    %v229 = vpack.c.b16 %v202, %v201
    %v230 = vpack.c.b16 %v204, %v203
    %v231 = vpack.c.b16 %v206, %v205
    %v232 = vpack.c.b16 %v208, %v207
    %v233 = vpack.c.b16 %v210, %v209
    %v234 = vpack.c.b16 %v212, %v211
    %v235 = vpack.c.b16 %v214, %v213
    %v236 = vpack.c.b16 %v216, %v215
    %v237 = vpack.c.b16 %v218, %v217
    %v238 = vpack.c.b16 %v220, %v219
    %v239 = vpack.c.b16 %v222, %v221
    %v240 = vpack.c.b16 %v224, %v223
    %257 = vmatprep.subr.bf16.mxu0 0
    %258 = vmatpush1.bf16.msra.mxu0 %v225
    %259 = vmatprep.subr.bf16.mxu0 0
    %260 = vmatpush1.bf16.msra.mxu0 %v226
    %261 = vmatprep.subr.bf16.mxu0 0
    %262 = vmatpush1.bf16.msra.mxu0 %v227
    %263 = vmatprep.subr.bf16.mxu0 0
    %264 = vmatpush1.bf16.msra.mxu0 %v228
    %265 = vmatprep.subr.bf16.mxu0 0
    %266 = vmatpush1.bf16.msra.mxu0 %v229
    %267 = vmatprep.subr.bf16.mxu0 0
    %268 = vmatpush1.bf16.msra.mxu0 %v230
    %269 = vmatprep.subr.bf16.mxu0 0
    %270 = vmatpush1.bf16.msra.mxu0 %v231
    %271 = vmatprep.subr.bf16.mxu0 0
    %272 = vmatpush1.bf16.msra.mxu0 %v232
    %273 = vmatprep.subr.bf16.mxu0 0
    %274 = vmatpush1.bf16.msra.mxu0 %v233
    %275 = vmatprep.subr.bf16.mxu0 0
    %276 = vmatpush1.bf16.msra.mxu0 %v234
    %277 = vmatprep.subr.bf16.mxu0 0
    %278 = vmatpush1.bf16.msra.mxu0 %v235
    %279 = vmatprep.subr.bf16.mxu0 0
    %280 = vmatpush1.bf16.msra.mxu0 %v236
    %281 = vmatprep.subr.bf16.mxu0 0
    %282 = vmatpush1.bf16.msra.mxu0 %v237
    %283 = vmatprep.subr.bf16.mxu0 0
    %284 = vmatpush1.bf16.msra.mxu0 %v238
    %285 = vmatprep.subr.bf16.mxu0 0
    %286 = vmatpush1.bf16.msra.mxu0 %v239
    %287 = vmatprep.subr.bf16.mxu0 0
    %288 = vmatpush1.bf16.msra.mxu0 %v240
    %289 = vmatprep.mubr.bf16.mxu0 %v160
    %290 = vmatmul.mubr.bf16.gmra.mrb[0].mxu0 %v159
    %v291 = vpop.f32.mrb[0].mxu0
    %v292 = vadd.f32 %v158, %v291
    %v293 = vpop.f32.mrb[0].mxu0
    %v294 = vpop.f32.mrb[0].mxu0
    %v295 = vpop.f32.mrb[0].mxu0
    %296 = vdwg.mxu0
    %v297 = vmax.f32 %v292, 0.0
    %v298 = vld [vmem:[#allocation4 + $0x108] sm:$0xf]
    %v299 = vld [vmem:[#allocation4 + $0x110] sm:$0xf]
    %v300 = vld [vmem:[#allocation4 + $0x118] sm:$0xf]
    %v301 = vld [vmem:[#allocation4 + $0x120] sm:$0xf]
    %v302 = vld [vmem:[#allocation4 + $0x128] sm:$0xf]
    %v303 = vld [vmem:[#allocation4 + $0x130] sm:$0xf]
    %v304 = vld [vmem:[#allocation4 + $0x138] sm:$0xf]
    %v305 = vld [vmem:[#allocation4 + $0x140] sm:$0xf]
    %v306 = vld [vmem:[#allocation4 + $0x148] sm:$0xf]
    %v307 = vld [vmem:[#allocation4 + $0x150] sm:$0xf]
    %v308 = vld [vmem:[#allocation4 + $0x158] sm:$0xf]
    %v309 = vld [vmem:[#allocation4 + $0x160] sm:$0xf]
    %v310 = vld [vmem:[#allocation4 + $0x168] sm:$0xf]
    %v311 = vld [vmem:[#allocation4 + $0x170] sm:$0xf]
    %v312 = vld [vmem:[#allocation4 + $0x178] sm:$0xf]
    %v313 = vld [vmem:[#allocation4 + $0x180] sm:$0xf]
    %v314 = vld [vmem:[#allocation6 + $0x2] ss:$0 sm:$0xff]
    %v315 = vpack.c.bf16 %v297, %v297
    %v332 = vunpack.c.l.b16 %v298
    %v333 = vunpack.c.l.b16 %v299
    %v334 = vunpack.c.l.b16 %v300
    %v335 = vunpack.c.l.b16 %v301
    %v336 = vunpack.c.l.b16 %v302
    %v337 = vunpack.c.l.b16 %v303
    %v338 = vunpack.c.l.b16 %v304
    %v339 = vunpack.c.l.b16 %v305
    %v340 = vunpack.c.l.b16 %v306
    %v341 = vunpack.c.l.b16 %v307
    %v342 = vunpack.c.l.b16 %v308
    %v343 = vunpack.c.l.b16 %v309
    %v344 = vunpack.c.l.b16 %v310
    %v345 = vunpack.c.l.b16 %v311
    %v346 = vunpack.c.l.b16 %v312
    %v347 = vunpack.c.l.b16 %v313
    %v348 = vpack.c.b16 %v333, %v332
    %v349 = vpack.c.b16 %v335, %v334
    %v350 = vpack.c.b16 %v337, %v336
    %v351 = vpack.c.b16 %v339, %v338
    %v352 = vpack.c.b16 %v341, %v340
    %v353 = vpack.c.b16 %v343, %v342
    %v354 = vpack.c.b16 %v345, %v344
    %v355 = vpack.c.b16 %v347, %v346
    %364 = vmatprep.subr.bf16.mxu0 0
    %365 = vmatpush1.bf16.msra.mxu0 %v348
    %366 = vmatprep.subr.bf16.mxu0 0
    %367 = vmatpush1.bf16.msra.mxu0 %v349
    %368 = vmatprep.subr.bf16.mxu0 0
    %369 = vmatpush1.bf16.msra.mxu0 %v350
    %370 = vmatprep.subr.bf16.mxu0 0
    %371 = vmatpush1.bf16.msra.mxu0 %v351
    %372 = vmatprep.subr.bf16.mxu0 0
    %373 = vmatpush1.bf16.msra.mxu0 %v352
    %374 = vmatprep.subr.bf16.mxu0 0
    %375 = vmatpush1.bf16.msra.mxu0 %v353
    %376 = vmatprep.subr.bf16.mxu0 0
    %377 = vmatpush1.bf16.msra.mxu0 %v354
    %378 = vmatprep.subr.bf16.mxu0 0
    %379 = vmatpush1.bf16.msra.mxu0 %v355
    %380 = vmatprep.subr.bf16.mxu0 0
    %381 = vmatpush1.bf16.msra.mxu0 0
    %382 = vmatprep.subr.bf16.mxu0 0
    %383 = vmatpush1.bf16.msra.mxu0 0
    %384 = vmatprep.subr.bf16.mxu0 0
    %385 = vmatpush1.bf16.msra.mxu0 0
    %386 = vmatprep.subr.bf16.mxu0 0
    %387 = vmatpush1.bf16.msra.mxu0 0
    %388 = vmatprep.subr.bf16.mxu0 0
    %389 = vmatpush1.bf16.msra.mxu0 0
    %390 = vmatprep.subr.bf16.mxu0 0
    %391 = vmatpush1.bf16.msra.mxu0 0
    %392 = vmatprep.subr.bf16.mxu0 0
    %393 = vmatpush1.bf16.msra.mxu0 0
    %394 = vmatprep.subr.bf16.mxu0 0
    %395 = vmatpush1.bf16.msra.mxu0 0
    %396 = vmatprep.mubr.bf16.mxu0 0
    %397 = vmatmul.mubr.bf16.gmra.mrb[0].mxu0 %v315
    %v398 = vpop.f32.mrb[0].mxu0
    %v399 = vadd.f32 %v314, %v398
    %v400 = vpop.f32.mrb[0].mxu0
    %v401 = vpop.f32.mrb[0].mxu0
    %v402 = vpop.f32.mrb[0].mxu0
    %403 = vdwg.mxu0
    %v404 = vmax.f32 %v399, 0.0
    %v405 = vld [vmem:[#allocation4 + $0x188] sm:$0xf]
    %v406 = vld [vmem:[#allocation4 + $0x190] sm:$0xf]
    %v407 = vld [vmem:[#allocation4 + $0x198] sm:$0xf]
    %v408 = vld [vmem:[#allocation4 + $0x1a0] sm:$0xf]
    %v409 = vld [vmem:[#allocation4 + $0x1a8] sm:$0xf]
    %v410 = vld [vmem:[#allocation4 + $0x1b0] sm:$0xf]
    %v411 = vld [vmem:[#allocation4 + $0x1b8] sm:$0xf]
    %v412 = vld [vmem:[#allocation4 + $0x1c0] sm:$0xf]
    %v413 = vld [vmem:[#allocation6 + $0x3] ss:$0 sm:$0xff]
    %v414 = vpack.c.bf16 %v404, %v404
    %v423 = vunpack.c.l.b16 %v405
    %v424 = vunpack.c.l.b16 %v406
    %v425 = vunpack.c.l.b16 %v407
    %v426 = vunpack.c.l.b16 %v408
    %v427 = vunpack.c.l.b16 %v409
    %v428 = vunpack.c.l.b16 %v410
    %v429 = vunpack.c.l.b16 %v411
    %v430 = vunpack.c.l.b16 %v412
    %v431 = vpack.c.b16 %v424, %v423
    %v432 = vpack.c.b16 %v426, %v425
    %v433 = vpack.c.b16 %v428, %v427
    %v434 = vpack.c.b16 %v430, %v429
    %vm439 = vcmask 523264
    %v441 = vsel %vm439, %v414, 0
    %443 = vmatprep.subr.bf16.mxu0 0
    %444 = vmatpush1.bf16.msra.mxu0 %v431
    %445 = vmatprep.subr.bf16.mxu0 0
    %446 = vmatpush1.bf16.msra.mxu0 %v432
    %447 = vmatprep.subr.bf16.mxu0 0
    %448 = vmatpush1.bf16.msra.mxu0 %v433
    %449 = vmatprep.subr.bf16.mxu0 0
    %450 = vmatpush1.bf16.msra.mxu0 %v434
    %451 = vmatprep.subr.bf16.mxu0 0
    %452 = vmatpush1.bf16.msra.mxu0 0
    %453 = vmatprep.subr.bf16.mxu0 0
    %454 = vmatpush1.bf16.msra.mxu0 0
    %455 = vmatprep.subr.bf16.mxu0 0
    %456 = vmatpush1.bf16.msra.mxu0 0
    %457 = vmatprep.subr.bf16.mxu0 0
    %458 = vmatpush1.bf16.msra.mxu0 0
    %459 = vmatprep.subr.bf16.mxu0 0
    %460 = vmatpush1.bf16.msra.mxu0 0
    %461 = vmatprep.subr.bf16.mxu0 0
    %462 = vmatpush1.bf16.msra.mxu0 0
    %463 = vmatprep.subr.bf16.mxu0 0
    %464 = vmatpush1.bf16.msra.mxu0 0
    %465 = vmatprep.subr.bf16.mxu0 0
    %466 = vmatpush1.bf16.msra.mxu0 0
    %467 = vmatprep.subr.bf16.mxu0 0
    %468 = vmatpush1.bf16.msra.mxu0 0
    %469 = vmatprep.subr.bf16.mxu0 0
    %470 = vmatpush1.bf16.msra.mxu0 0
    %471 = vmatprep.subr.bf16.mxu0 0
    %472 = vmatpush1.bf16.msra.mxu0 0
    %473 = vmatprep.subr.bf16.mxu0 0
    %474 = vmatpush1.bf16.msra.mxu0 0
    %475 = vmatprep.mubr.bf16.mxu0 0
    %476 = vmatmul.mubr.bf16.gmra.mrb[0].mxu0 %v441
    %v477 = vpop.f32.mrb[0].mxu0
    %v478 = vadd.f32 %v413, %v477
    %v479 = vpop.f32.mrb[0].mxu0
    %v480 = vpop.f32.mrb[0].mxu0
    %v481 = vpop.f32.mrb[0].mxu0
    %482 = vdwg.mxu0
    %v483 = vmax.f32 %v478, 0.0
    %v484 = vld [vmem:[#allocation4 + $0x1c8] sm:$0xf]
    %v485 = vld [vmem:[#allocation4 + $0x1d0] sm:$0xf]
    %v486 = vld [vmem:[#allocation4 + $0x1d8] sm:$0xf]
    %v487 = vld [vmem:[#allocation4 + $0x1e0] sm:$0xf]
    %v488 = vld [vmem:[#allocation6 + $0x4] ss:$0 sm:$0xff]
    %v489 = vpack.c.bf16 %v483, %v483
    %v494 = vunpack.c.l.b16 %v484
    %v495 = vunpack.c.l.b16 %v485
    %v496 = vunpack.c.l.b16 %v486
    %v497 = vunpack.c.l.b16 %v487
    %v498 = vpack.c.b16 %v495, %v494
    %v499 = vpack.c.b16 %v497, %v496
    %vm502 = vcmask 261120
    %v504 = vsel %vm502, %v489, 0
    %506 = vmatprep.subr.bf16.mxu0 0
    %507 = vmatpush1.bf16.msra.mxu0 %v498
    %508 = vmatprep.subr.bf16.mxu0 0
    %509 = vmatpush1.bf16.msra.mxu0 %v499
    %510 = vmatprep.subr.bf16.mxu0 0
    %511 = vmatpush1.bf16.msra.mxu0 0
    %512 = vmatprep.subr.bf16.mxu0 0
    %513 = vmatpush1.bf16.msra.mxu0 0
    %514 = vmatprep.subr.bf16.mxu0 0
    %515 = vmatpush1.bf16.msra.mxu0 0
    %516 = vmatprep.subr.bf16.mxu0 0
    %517 = vmatpush1.bf16.msra.mxu0 0
    %518 = vmatprep.subr.bf16.mxu0 0
    %519 = vmatpush1.bf16.msra.mxu0 0
    %520 = vmatprep.subr.bf16.mxu0 0
    %521 = vmatpush1.bf16.msra.mxu0 0
    %522 = vmatprep.subr.bf16.mxu0 0
    %523 = vmatpush1.bf16.msra.mxu0 0
    %524 = vmatprep.subr.bf16.mxu0 0
    %525 = vmatpush1.bf16.msra.mxu0 0
    %526 = vmatprep.subr.bf16.mxu0 0
    %527 = vmatpush1.bf16.msra.mxu0 0
    %528 = vmatprep.subr.bf16.mxu0 0
    %529 = vmatpush1.bf16.msra.mxu0 0
    %530 = vmatprep.subr.bf16.mxu0 0
    %531 = vmatpush1.bf16.msra.mxu0 0
    %532 = vmatprep.subr.bf16.mxu0 0
    %533 = vmatpush1.bf16.msra.mxu0 0
    %534 = vmatprep.subr.bf16.mxu0 0
    %535 = vmatpush1.bf16.msra.mxu0 0
    %536 = vmatprep.subr.bf16.mxu0 0
    %537 = vmatpush1.bf16.msra.mxu0 0
    %538 = vmatprep.mubr.bf16.mxu0 0
    %539 = vmatmul.mubr.bf16.gmra.mrb[0].mxu0 %v504
    %v540 = vpop.f32.mrb[0].mxu0
    %v541 = vadd.f32 %v488, %v540
    %v542 = vpop.f32.mrb[0].mxu0
    %v543 = vpop.f32.mrb[0].mxu0
    %v544 = vpop.f32.mrb[0].mxu0
    %545 = vdwg.mxu0
    %v546 = vmax.f32 %v541, 0.0
    %v547 = vld [vmem:[#allocation4 + $0x1e8] sm:$0xf]
    %v548 = vld [vmem:[#allocation4 + $0x1f0] sm:$0xf]
    %v549 = vld [vmem:[#allocation6 + $0x5] ss:$0 sm:$0xff]
    %v550 = vpack.c.bf16 %v546, %v546
    %v553 = vunpack.c.l.b16 %v547
    %v554 = vunpack.c.l.b16 %v548
    %v555 = vpack.c.b16 %v554, %v553
    %vm557 = vcmask 130048
    %v559 = vsel %vm557, %v550, 0
    %561 = vmatprep.subr.bf16.mxu0 0
    %562 = vmatpush1.bf16.msra.mxu0 %v555
    %563 = vmatprep.subr.bf16.mxu0 0
    %564 = vmatpush1.bf16.msra.mxu0 0
    %565 = vmatprep.subr.bf16.mxu0 0
    %566 = vmatpush1.bf16.msra.mxu0 0
    %567 = vmatprep.subr.bf16.mxu0 0
    %568 = vmatpush1.bf16.msra.mxu0 0
    %569 = vmatprep.subr.bf16.mxu0 0
    %570 = vmatpush1.bf16.msra.mxu0 0
    %571 = vmatprep.subr.bf16.mxu0 0
    %572 = vmatpush1.bf16.msra.mxu0 0
    %573 = vmatprep.subr.bf16.mxu0 0
    %574 = vmatpush1.bf16.msra.mxu0 0
    %575 = vmatprep.subr.bf16.mxu0 0
    %576 = vmatpush1.bf16.msra.mxu0 0
    %577 = vmatprep.subr.bf16.mxu0 0
    %578 = vmatpush1.bf16.msra.mxu0 0
    %579 = vmatprep.subr.bf16.mxu0 0
    %580 = vmatpush1.bf16.msra.mxu0 0
    %581 = vmatprep.subr.bf16.mxu0 0
    %582 = vmatpush1.bf16.msra.mxu0 0
    %583 = vmatprep.subr.bf16.mxu0 0
    %584 = vmatpush1.bf16.msra.mxu0 0
    %585 = vmatprep.subr.bf16.mxu0 0
    %586 = vmatpush1.bf16.msra.mxu0 0
    %587 = vmatprep.subr.bf16.mxu0 0
    %588 = vmatpush1.bf16.msra.mxu0 0
    %589 = vmatprep.subr.bf16.mxu0 0
    %590 = vmatpush1.bf16.msra.mxu0 0
    %591 = vmatprep.subr.bf16.mxu0 0
    %592 = vmatpush1.bf16.msra.mxu0 0
    %593 = vmatprep.mubr.bf16.mxu0 0
    %594 = vmatmul.mubr.bf16.gmra.mrb[0].mxu0 %v559
    %v595 = vpop.f32.mrb[0].mxu0
    %v596 = vadd.f32 %v549, %v595
    %v597 = vpop.f32.mrb[0].mxu0
    %v598 = vpop.f32.mrb[0].mxu0
    %v599 = vpop.f32.mrb[0].mxu0
    %600 = vdwg.mxu0
    %vm601 = vcmask 15360
    %v602 = vsel %vm601, %v596, -inf
    %603 = vmax.xlane.f32.xlu0 %v602
    %v604 = vpop.xlane.xlu0 %603
    %v605 = vsub.f32 %v596, %v604
    %v606 = vmul.f32 %v605, 1.442695
    %v607 = vpow.pop %v606
    %v608 = vsel %vm601, %v607, 0.0
    %609 = vadd.xlane.f32.xlu0 %v608
    %v610 = vpop.xlane.xlu0 %609
    %v611 = vrcp.pop %v610
    %v612 = vmul.f32 %v607, %v611
    %613 = vst.msk [vmem:[%s3] sm:$0xff] %vm601, %v612
    // Predicated region
    $region26: #{tpu_custom_call.1} parent=1 // pred_check
      _
    $region27: #{tpu_custom_call.1} parent=1 // pred_check_branch
      %615 = sbr.rel (0) target = $region29
    $region28: #{tpu_custom_call.1} parent=1 // pred_region
      _
    $region29: #{tpu_custom_call.1} parent=1 // pred_fallthru
      _
    // Predicated region
    $region30: #{tpu_custom_call.1} parent=1 // pred_check
      _
    $region31: #{tpu_custom_call.1} parent=1 // pred_check_branch
      %617 = sbr.rel (0) target = $region33
    $region32: #{tpu_custom_call.1} parent=1 // pred_region
      _
    $region33: #{tpu_custom_call.1} parent=1 // pred_fallthru
      _
    %618 = vsyncpa [#allocation3], 1
    %619 = vsyncpa [#allocation5], 1

</llo_original>
